<compile_context>
chip_gen: v7x
topology: tpu7x:2x2x1
jax: 0.10.0
libtpu: 0.0.40
codegen_flags: <defaults>
</compile_context>

<pallas_src>
import jax
import jax.numpy as jnp
from jax.experimental import pallas as pl
from jax.experimental.pallas import tpu as pltpu

D_IN = 28 * 28       # 784
D_HID = 256
D_OUT = 1
NEG_SLOPE = 0.01     # PyTorch nn.LeakyReLU default
MAX_TB = 1024        # batch-tile cap (f32 x tile = 3.2 MB, double-buffered 6.4 MB)


def _leaky_relu(x):
    return jnp.where(x > 0, x, NEG_SLOPE * x)


def d_mlp_kernel(x_ref, w1_ref, b1_ref, w2_ref, b2_ref, w3_ref, b3_ref, o_ref):
    # Layer 1: Linear(784 -> 256).  Cast x to bf16 in-kernel (no wrapper copy,
    # no-op if the caller already supplies bf16); bf16 MXU operands, f32 acc.
    # Dropout(0.1) = identity (eval mode).
    x = x_ref[...].astype(jnp.bfloat16)
    h = jnp.dot(x, w1_ref[...], preferred_element_type=jnp.float32)
    h = _leaky_relu(h + b1_ref[...])

    # Layer 2: Linear(256 -> 256), activations re-cast to bf16 for the MXU.
    h = jnp.dot(h.astype(jnp.bfloat16), w2_ref[...],
                preferred_element_type=jnp.float32)
    h = _leaky_relu(h + b2_ref[...])

    # Layer 3: Linear(256 -> 1) as a VPU multiply + cross-lane reduce
    # (an N=1 MXU matmul would waste the systolic array).
    logits = jnp.sum(h * w3_ref[...], axis=-1, keepdims=True) + b3_ref[...]

    # Sigmoid: exp on the EUP, approximate reciprocal also on the EUP.
    o_ref[...] = pl.reciprocal(1.0 + jnp.exp(-logits), approx=True).astype(o_ref.dtype)


def _round_up(v, m):
    return ((v + m - 1) // m) * m


def d_forward(x, w1_bf, b1, w2_bf, b2, w3_row, b3):
    """Discriminator forward.

    x:      (B, 784) f32 or bf16 (cast to bf16 inside the kernel)
    w1_bf:  (784, 256) bf16      w2_bf: (256, 256) bf16    -- (in, out) layout
    b1, b2: (1, 256)  f32        w3_row: (1, 256) f32      b3: (1, 1) f32
    """
    B = x.shape[0]

    # Batch tile: multiple of 16 (bf16 sublane packing), capped at MAX_TB.
    # For B > 16 force >= 2 tiles so the "parallel" axis has work to split
    # across v7x's two TensorCores.
    if B <= 16:
        tb = _round_up(max(B, 1), 16)
    else:
        tb = min(MAX_TB, _round_up((B + 1) // 2, 16))
    b_pad = _round_up(B, tb)
    grid_b = b_pad // tb

    # Pad only the batch tail (no K pad, no dtype-cast copy in the wrapper).
    if b_pad != B:
        x = jnp.pad(x, ((0, b_pad - B), (0, 0)))

    out = pl.pallas_call(
        d_mlp_kernel,
        out_shape=jax.ShapeDtypeStruct((b_pad, D_OUT), jnp.float32),
        grid_spec=pltpu.PrefetchScalarGridSpec(
            num_scalar_prefetch=0,
            grid=(grid_b,),
            in_specs=[
                pl.BlockSpec((tb, D_IN), lambda i: (i, 0)),      # x tile (streamed)
                pl.BlockSpec((D_IN, D_HID), lambda i: (0, 0)),   # w1 (VMEM-resident)
                pl.BlockSpec((1, D_HID), lambda i: (0, 0)),      # b1
                pl.BlockSpec((D_HID, D_HID), lambda i: (0, 0)),  # w2 (VMEM-resident)
                pl.BlockSpec((1, D_HID), lambda i: (0, 0)),      # b2
                pl.BlockSpec((1, D_HID), lambda i: (0, 0)),      # w3 row
                pl.BlockSpec((1, D_OUT), lambda i: (0, 0)),      # b3
            ],
            out_specs=pl.BlockSpec((tb, D_OUT), lambda i: (i, 0)),
        ),
        compiler_params=pltpu.CompilerParams(
            dimension_semantics=("parallel",),   # shard batch tiles across TCs
            vmem_limit_bytes=32 << 20,
        ),
    )(x, w1_bf, b1, w2_bf, b2, w3_row, b3)
    return out[:B]


def init_params(key):
    """Deterministic PyTorch-style Linear init; weights stored (in, out)."""
    def lin(k, fan_in, fan_out):
        bound = 1.0 / jnp.sqrt(fan_in)
        kw, kb = jax.random.split(k)
        w = jax.random.uniform(kw, (fan_in, fan_out), jnp.float32, -bound, bound)
        b = jax.random.uniform(kb, (1, fan_out), jnp.float32, -bound, bound)
        return w, b

    k1, k2, k3 = jax.random.split(key, 3)
    w1, b1 = lin(k1, D_IN, D_HID)
    w2, b2 = lin(k2, D_HID, D_HID)
    w3, b3 = lin(k3, D_HID, D_OUT)
    return w1, b1, w2, b2, w3, b3


def prepare_params(w1, b1, w2, b2, w3, b3):
    """One-time weight marshaling, hoisted out of the per-call forward:
    bf16 MXU weights and w3 stored as a (1, 256) row for the in-kernel reduce."""
    return (w1.astype(jnp.bfloat16), b1,
            w2.astype(jnp.bfloat16), b2,
            w3.T.astype(jnp.float32), b3)


if __name__ == "__main__":
    key = jax.random.PRNGKey(0)
    kx, kp = jax.random.split(key)

    B = 8
    x = jax.random.normal(kx, (B, D_IN), jnp.float32)

    raw_params = init_params(kp)
    params = prepare_params(*raw_params)          # hoisted: runs once, not per call

    fwd = jax.jit(d_forward)
    out = jax.block_until_ready(fwd(x, *params))

    # Pure-JAX reference applying the same bf16 quantization the kernel uses
    # (eval-mode dropout = identity).
    w1, b1, w2, b2, w3, b3 = raw_params
    x32 = x.astype(jnp.bfloat16).astype(jnp.float32)
    w1_32 = w1.astype(jnp.bfloat16).astype(jnp.float32)
    w2_32 = w2.astype(jnp.bfloat16).astype(jnp.float32)

    def lrelu(t):
        return jnp.where(t > 0, t, NEG_SLOPE * t)

    h = lrelu(x32 @ w1_32 + b1)
    h = lrelu(h.astype(jnp.bfloat16).astype(jnp.float32) @ w2_32 + b2)
    ref = jax.nn.sigmoid(h @ w3 + b3)

    assert out.shape == (B, 1), out.shape
    assert jnp.allclose(out, ref, atol=5e-3, rtol=5e-3), (
        float(jnp.max(jnp.abs(out - ref))))

    print("KERNEL_OK")
</pallas_src>

<mosaic_0001>
module attributes {stable_mosaic.version = 11 : i64} {
  func.func @d_mlp_kernel(%arg0: i32, %arg1: memref<16x784xf32, #tpu.memory_space<vmem>>, %arg2: memref<784x256xbf16, #tpu.memory_space<vmem>>, %arg3: memref<1x256xf32, #tpu.memory_space<vmem>>, %arg4: memref<256x256xbf16, #tpu.memory_space<vmem>>, %arg5: memref<1x256xf32, #tpu.memory_space<vmem>>, %arg6: memref<1x256xf32, #tpu.memory_space<vmem>>, %arg7: memref<1x1xf32, #tpu.memory_space<vmem>>, %arg8: memref<16x1xf32, #tpu.memory_space<vmem>>) attributes {dimension_semantics = [#tpu.dimension_semantics<parallel>], iteration_bounds = array<i64: 1>, scalar_prefetch = 0 : i64, scratch_operands = 0 : i64, tpu.core_type = #tpu.core_type<tc>, window_params = [{transform_indices = @transform_0, window_bounds = array<i64: 16, 784>}, {pipeline_mode = #tpu.pipeline_mode<synchronous>, transform_indices = @transform_1, window_bounds = array<i64: 784, 256>}, {pipeline_mode = #tpu.pipeline_mode<synchronous>, transform_indices = @transform_2, window_bounds = array<i64: 1, 256>}, {pipeline_mode = #tpu.pipeline_mode<synchronous>, transform_indices = @transform_3, window_bounds = array<i64: 256, 256>}, {pipeline_mode = #tpu.pipeline_mode<synchronous>, transform_indices = @transform_4, window_bounds = array<i64: 1, 256>}, {pipeline_mode = #tpu.pipeline_mode<synchronous>, transform_indices = @transform_5, window_bounds = array<i64: 1, 256>}, {pipeline_mode = #tpu.pipeline_mode<synchronous>, transform_indices = @transform_6, window_bounds = array<i64: 1, 1>}, {transform_indices = @transform_7, window_bounds = array<i64: 16, 1>}]} {
    %c0 = arith.constant 0 : index
    %c0_0 = arith.constant 0 : index
    %0 = vector.load %arg1[%c0, %c0_0] : memref<16x784xf32, #tpu.memory_space<vmem>>, vector<16x784xf32>
    %1 = arith.truncf %0 : vector<16x784xf32> to vector<16x784xbf16>
    %c0_1 = arith.constant 0 : index
    %c0_2 = arith.constant 0 : index
    %2 = vector.load %arg2[%c0_1, %c0_2] : memref<784x256xbf16, #tpu.memory_space<vmem>>, vector<784x256xbf16>
    %cst = arith.constant dense<0.000000e+00> : vector<16x256xf32>
    %3 = tpu.matmul %1, %2, %cst {dimension_numbers = #tpu.dot_dimension_numbers<[1], [0], [0], [1], [0, 0, 1, 1], [], []>} : vector<16x784xbf16>, vector<784x256xbf16>, vector<16x256xf32> -> vector<16x256xf32>
    %c0_3 = arith.constant 0 : index
    %c0_4 = arith.constant 0 : index
    %4 = vector.load %arg3[%c0_3, %c0_4] : memref<1x256xf32, #tpu.memory_space<vmem>>, vector<1x256xf32>
    %5 = vector.broadcast %4 : vector<1x256xf32> to vector<16x256xf32>
    %6 = arith.addf %3, %5 : vector<16x256xf32>
    %cst_5 = arith.constant 0.000000e+00 : f32
    %7 = vector.broadcast %cst_5 : f32 to vector<16x256xf32>
    %8 = arith.cmpf ogt, %6, %7 : vector<16x256xf32>
    %cst_6 = arith.constant 0.00999999977 : f32
    %9 = vector.broadcast %cst_6 : f32 to vector<16x256xf32>
    %10 = arith.mulf %9, %6 : vector<16x256xf32>
    %11 = arith.select %8, %6, %10 : vector<16x256xi1>, vector<16x256xf32>
    %12 = arith.truncf %11 : vector<16x256xf32> to vector<16x256xbf16>
    %c0_7 = arith.constant 0 : index
    %c0_8 = arith.constant 0 : index
    %13 = vector.load %arg4[%c0_7, %c0_8] : memref<256x256xbf16, #tpu.memory_space<vmem>>, vector<256x256xbf16>
    %cst_9 = arith.constant dense<0.000000e+00> : vector<16x256xf32>
    %14 = tpu.matmul %12, %13, %cst_9 {dimension_numbers = #tpu.dot_dimension_numbers<[1], [0], [0], [1], [0, 0, 1, 1], [], []>} : vector<16x256xbf16>, vector<256x256xbf16>, vector<16x256xf32> -> vector<16x256xf32>
    %c0_10 = arith.constant 0 : index
    %c0_11 = arith.constant 0 : index
    %15 = vector.load %arg5[%c0_10, %c0_11] : memref<1x256xf32, #tpu.memory_space<vmem>>, vector<1x256xf32>
    %16 = vector.broadcast %15 : vector<1x256xf32> to vector<16x256xf32>
    %17 = arith.addf %14, %16 : vector<16x256xf32>
    %cst_12 = arith.constant 0.000000e+00 : f32
    %18 = vector.broadcast %cst_12 : f32 to vector<16x256xf32>
    %19 = arith.cmpf ogt, %17, %18 : vector<16x256xf32>
    %cst_13 = arith.constant 0.00999999977 : f32
    %20 = vector.broadcast %cst_13 : f32 to vector<16x256xf32>
    %21 = arith.mulf %20, %17 : vector<16x256xf32>
    %22 = arith.select %19, %17, %21 : vector<16x256xi1>, vector<16x256xf32>
    %c0_14 = arith.constant 0 : index
    %c0_15 = arith.constant 0 : index
    %23 = vector.load %arg6[%c0_14, %c0_15] : memref<1x256xf32, #tpu.memory_space<vmem>>, vector<1x256xf32>
    %24 = vector.broadcast %23 : vector<1x256xf32> to vector<16x256xf32>
    %25 = arith.mulf %22, %24 : vector<16x256xf32>
    %cst_16 = arith.constant dense<0.000000e+00> : vector<16xf32>
    %26 = vector.multi_reduction <add>, %25, %cst_16 [1] : vector<16x256xf32> to vector<16xf32>
    %27 = vector.shape_cast %26 : vector<16xf32> to vector<16x1xf32>
    %c0_17 = arith.constant 0 : index
    %c0_18 = arith.constant 0 : index
    %28 = vector.load %arg7[%c0_17, %c0_18] : memref<1x1xf32, #tpu.memory_space<vmem>>, vector<1x1xf32>
    %29 = vector.broadcast %28 : vector<1x1xf32> to vector<16x1xf32>
    %30 = arith.addf %27, %29 : vector<16x1xf32>
    %cst_19 = arith.constant 0.000000e+00 : f32
    %31 = vector.broadcast %cst_19 : f32 to vector<16x1xf32>
    %32 = arith.subf %31, %30 : vector<16x1xf32>
    %33 = math.exp %32 : vector<16x1xf32>
    %cst_20 = arith.constant 1.000000e+00 : f32
    %34 = vector.broadcast %cst_20 : f32 to vector<16x1xf32>
    %35 = arith.addf %34, %33 : vector<16x1xf32>
    %36 = tpu.reciprocal %35 {approx = true} : vector<16x1xf32> -> vector<16x1xf32>
    %c0_21 = arith.constant 0 : index
    %c0_22 = arith.constant 0 : index
    %37 = vector.load %arg8[%c0_21, %c0_22] : memref<16x1xf32, #tpu.memory_space<vmem>>, vector<16x1xf32>
    tpu.vector_store %arg8[%c0_21, %c0_22], %36 {strides = array<i32>} : memref<16x1xf32, #tpu.memory_space<vmem>>, vector<16x1xf32>,
    return
  }
  func.func @transform_0(%arg0: i32) -> (i32, i32) {
    %c0_i32 = arith.constant 0 : i32
    %c0_i32_0 = arith.constant 0 : i32
    return %arg0, %c0_i32 : i32, i32
  }
  func.func @transform_1(%arg0: i32) -> (i32, i32) {
    %c0_i32 = arith.constant 0 : i32
    %c0_i32_0 = arith.constant 0 : i32
    %c0_i32_1 = arith.constant 0 : i32
    return %c0_i32, %c0_i32_0 : i32, i32
  }
  func.func @transform_2(%arg0: i32) -> (i32, i32) {
    %c0_i32 = arith.constant 0 : i32
    %c0_i32_0 = arith.constant 0 : i32
    %c0_i32_1 = arith.constant 0 : i32
    return %c0_i32, %c0_i32_0 : i32, i32
  }
  func.func @transform_3(%arg0: i32) -> (i32, i32) {
    %c0_i32 = arith.constant 0 : i32
    %c0_i32_0 = arith.constant 0 : i32
    %c0_i32_1 = arith.constant 0 : i32
    return %c0_i32, %c0_i32_0 : i32, i32
  }
  func.func @transform_4(%arg0: i32) -> (i32, i32) {
    %c0_i32 = arith.constant 0 : i32
    %c0_i32_0 = arith.constant 0 : i32
    %c0_i32_1 = arith.constant 0 : i32
    return %c0_i32, %c0_i32_0 : i32, i32
  }
  func.func @transform_5(%arg0: i32) -> (i32, i32) {
    %c0_i32 = arith.constant 0 : i32
    %c0_i32_0 = arith.constant 0 : i32
    %c0_i32_1 = arith.constant 0 : i32
    return %c0_i32, %c0_i32_0 : i32, i32
  }
  func.func @transform_6(%arg0: i32) -> (i32, i32) {
    %c0_i32 = arith.constant 0 : i32
    %c0_i32_0 = arith.constant 0 : i32
    %c0_i32_1 = arith.constant 0 : i32
    return %c0_i32, %c0_i32_0 : i32, i32
  }
  func.func @transform_7(%arg0: i32) -> (i32, i32) {
    %c0_i32 = arith.constant 0 : i32
    %c0_i32_0 = arith.constant 0 : i32
    return %arg0, %c0_i32 : i32, i32
  }
}

</mosaic_0001>

<llo_original>
// kernel: d_forward.1
$region0: #{d_forward.1}
  #allocation0 [shape = 'u32[]', space=smem, size = 0x4, offset = 0x4, fixed_abs, tag = 'smem constant byte address 0x4 - core index']
  #allocation1 [shape = 'u32[144,128]{1,0:T(1,128)}', space=vmem, size = 0x12000, scoped, tag = 'internal scratch']
  #allocation2 [shape = 'f32[1,1]{1,0:T(1,128)S(1)}', space=vmem, size = 0x200, scoped, tag = 'scoped memory for d_forward.1']
  %s0 = inlined_call_operand.vmem [shape: f32[16,784], index: 0, kind: input, shape index: {}]
  %s1 = inlined_call_operand.hbm [shape: bf16[784,256], index: 1, kind: input, shape index: {}]
  %s2 = inlined_call_operand.vmem [shape: f32[1,256], index: 2, kind: input, shape index: {}]
  %s3 = inlined_call_operand.hbm [shape: bf16[256,256], index: 3, kind: input, shape index: {}]
  %s4 = inlined_call_operand.vmem [shape: f32[1,256], index: 4, kind: input, shape index: {}]
  %s5 = inlined_call_operand.vmem [shape: f32[1,256], index: 5, kind: input, shape index: {}]
  %s6 = inlined_call_operand.<no memory space> [shape: f32[1,1], index: 6, kind: input, shape index: {}]
  %s7 = inlined_call_operand.vmem [shape: f32[16,1], index: 7, kind: output, shape index: {}]
  %s8 = sld [smem:[#allocation0]]
  $region46: #{d_forward.1} parent=0
    _
  %s10 = ssub.s32 1, %s8
  %s11 = scalar_select 0, %s10, %s8
  %v12 = vstv %s6
  %13 = vst [vmem:[#allocation2] sm:$0x1] %v12
  $region1: #{d_forward.1} parent=0
    #allocation3 [shape = 'u8[401408]{0}', space=vmem, size = 0x62000, scoped, tag = 'input window, operand 1, single buffered']
    #allocation4 [shape = 's32[1]{0}', space=sflag, size = 0x4, scoped, tag = 'scoped memory for d_forward.1']
    #allocation5 [shape = 'u8[131072]{0}', space=vmem, size = 0x20000, scoped, tag = 'input window, operand 3, single buffered']
    #allocation6 [shape = 's32[1]{0}', space=sflag, size = 0x4, scoped, tag = 'scoped memory for d_forward.1']
    %14 = vsyncpa [#allocation4], 0
    %15 = vsyncpa [#allocation6], 0
    // Predicated region
    $region2: #{d_forward.1} parent=1 // pred_check
      _
    $region3: #{d_forward.1} parent=1 // pred_check_branch
      %17 = sbr.rel (0) target = $region5
    $region4: #{d_forward.1} parent=1 // pred_region
      _
    $region5: #{d_forward.1} parent=1 // pred_fallthru
      _
    // Predicated region
    $region6: #{d_forward.1} parent=1 // pred_check
      _
    $region7: #{d_forward.1} parent=1 // pred_check_branch
      %19 = sbr.rel (0) target = $region9
    $region8: #{d_forward.1} parent=1 // pred_region
      %s21 = ssub.s32 12544, 12544
      %22 = vsyncadd [#allocation4], %s21
      %s23 = sshll.u32 [#allocation3], 4
      %s24 = int_to_ptr.vmem [resolvable:$true] %s23
      %29 = dma.hbm_to_vmem [thread:$0]  %s1, 12544, %s24, [#allocation4], 128, 128, 8
    $region9: #{d_forward.1} parent=1 // pred_fallthru
      _
    // Predicated region
    $region10: #{d_forward.1} parent=1 // pred_check
      _
    $region11: #{d_forward.1} parent=1 // pred_check_branch
      %31 = sbr.rel (0) target = $region13
    $region12: #{d_forward.1} parent=1 // pred_region
      _
    $region13: #{d_forward.1} parent=1 // pred_fallthru
      _
    // Predicated region
    $region14: #{d_forward.1} parent=1 // pred_check
      _
    $region15: #{d_forward.1} parent=1 // pred_check_branch
      %33 = sbr.rel (0) target = $region17
    $region16: #{d_forward.1} parent=1 // pred_region
      %s35 = ssub.s32 4096, 4096
      %36 = vsyncadd [#allocation6], %s35
      %s37 = sshll.u32 [#allocation5], 4
      %s38 = int_to_ptr.vmem [resolvable:$true] %s37
      %43 = dma.hbm_to_vmem [thread:$0]  %s3, 4096, %s38, [#allocation6], 128, 128, 8
    $region17: #{d_forward.1} parent=1 // pred_fallthru
      _
    // Predicated region
    $region18: #{d_forward.1} parent=1 // pred_check
      _
    $region19: #{d_forward.1} parent=1 // pred_check_branch
      %45 = sbr.rel (0) target = $region21
    $region20: #{d_forward.1} parent=1 // pred_region
      _
    $region21: #{d_forward.1} parent=1 // pred_fallthru
      _
    // Predicated region
    $region22: #{d_forward.1} parent=1 // pred_check
      _
    $region23: #{d_forward.1} parent=1 // pred_check_branch
      %47 = sbr.rel (0) target = $region25
    $region24: #{d_forward.1} parent=1 // pred_region
      _
    $region25: #{d_forward.1} parent=1 // pred_fallthru
      _
    // Predicated region
    $region26: #{d_forward.1} parent=1 // pred_check
      _
    $region27: #{d_forward.1} parent=1 // pred_check_branch
      %49 = sbr.rel (0) target = $region29
    $region28: #{d_forward.1} parent=1 // pred_region
      _
    $region29: #{d_forward.1} parent=1 // pred_fallthru
      _
    // Predicated region
    $region30: #{d_forward.1} parent=1 // pred_check
      _
    $region31: #{d_forward.1} parent=1 // pred_check_branch
      %51 = sbr.rel (0) target = $region33
    $region32: #{d_forward.1} parent=1 // pred_region
      %52 = dma.done [#allocation4], 12544
    $region33: #{d_forward.1} parent=1 // pred_fallthru
      _
    // Predicated region
    $region34: #{d_forward.1} parent=1 // pred_check
      _
    $region35: #{d_forward.1} parent=1 // pred_check_branch
      %54 = sbr.rel (0) target = $region37
    $region36: #{d_forward.1} parent=1 // pred_region
      %55 = dma.done [#allocation6], 4096
    $region37: #{d_forward.1} parent=1 // pred_fallthru
      _
    %v57 = vld [vmem:[%s0] sm:$0xff]
    %v58 = vld [vmem:[%s0 + $0x8] sm:$0xff]
    %v59 = vld [vmem:[%s0 + $0x10] sm:$0xff]
    %v60 = vld [vmem:[%s0 + $0x18] sm:$0xff]
    %v61 = vld [vmem:[%s0 + $0x20] sm:$0xff]
    %v62 = vld [vmem:[%s0 + $0x28] sm:$0xff]
    %v63 = vld [vmem:[%s0 + $0x30] sm:$0xff]
    %v64 = vld [vmem:[%s0 + $0x38] sm:$0xff]
    %v65 = vld [vmem:[%s0 + $0x40] sm:$0xff]
    %v66 = vld [vmem:[%s0 + $0x48] sm:$0xff]
    %v67 = vld [vmem:[%s0 + $0x50] sm:$0xff]
    %v68 = vld [vmem:[%s0 + $0x58] sm:$0xff]
    %v69 = vld [vmem:[%s0 + $0x60] sm:$0xff]
    %v70 = vld [vmem:[%s0 + $0x68] sm:$0xff]
    %v71 = vpack.c.bf16 %v64, %v57
    %v72 = vpack.c.bf16 %v65, %v58
    %v73 = vpack.c.bf16 %v66, %v59
    %v74 = vpack.c.bf16 %v67, %v60
    %v75 = vpack.c.bf16 %v68, %v61
    %v76 = vpack.c.bf16 %v69, %v62
    %v77 = vpack.c.bf16 %v70, %v63
    %v78 = vld [vmem:[#allocation3] sm:$0xff]
    %v79 = vld [vmem:[#allocation3 + $0x8] sm:$0xff]
    %v80 = vld [vmem:[#allocation3 + $0x10] sm:$0xff]
    %v81 = vld [vmem:[#allocation3 + $0x18] sm:$0xff]
    %v82 = vld [vmem:[#allocation3 + $0x20] sm:$0xff]
    %v83 = vld [vmem:[#allocation3 + $0x28] sm:$0xff]
    %v84 = vld [vmem:[#allocation3 + $0x30] sm:$0xff]
    %v85 = vld [vmem:[#allocation3 + $0x38] sm:$0xff]
    %v86 = vld [vmem:[#allocation3 + $0x40] sm:$0xff]
    %v87 = vld [vmem:[#allocation3 + $0x48] sm:$0xff]
    %v88 = vld [vmem:[#allocation3 + $0x50] sm:$0xff]
    %v89 = vld [vmem:[#allocation3 + $0x58] sm:$0xff]
    %v90 = vld [vmem:[#allocation3 + $0x60] sm:$0xff]
    %v91 = vld [vmem:[#allocation3 + $0x68] sm:$0xff]
    %v92 = vld [vmem:[#allocation3 + $0x70] sm:$0xff]
    %v93 = vld [vmem:[#allocation3 + $0x78] sm:$0xff]
    %v94 = vld [vmem:[#allocation3 + $0x80] sm:$0xff]
    %v95 = vld [vmem:[#allocation3 + $0x88] sm:$0xff]
    %v96 = vld [vmem:[#allocation3 + $0x90] sm:$0xff]
    %v97 = vld [vmem:[#allocation3 + $0x98] sm:$0xff]
    %v98 = vld [vmem:[#allocation3 + $0xa0] sm:$0xff]
    %v99 = vld [vmem:[#allocation3 + $0xa8] sm:$0xff]
    %v100 = vld [vmem:[#allocation3 + $0xb0] sm:$0xff]
    %v101 = vld [vmem:[#allocation3 + $0xb8] sm:$0xff]
    %v102 = vld [vmem:[#allocation3 + $0xc0] sm:$0xff]
    %v103 = vld [vmem:[#allocation3 + $0xc8] sm:$0xff]
    %v104 = vld [vmem:[#allocation3 + $0xd0] sm:$0xff]
    %v105 = vld [vmem:[#allocation3 + $0xd8] sm:$0xff]
    %v106 = vld [vmem:[#allocation3 + $0xe0] sm:$0xff]
    %v107 = vld [vmem:[#allocation3 + $0xe8] sm:$0xff]
    %v108 = vld [vmem:[#allocation3 + $0xf0] sm:$0xff]
    %v109 = vld [vmem:[#allocation3 + $0xf8] sm:$0xff]
    %v110 = vld [vmem:[#allocation3 + $0x100] sm:$0xff]
    %v111 = vld [vmem:[#allocation3 + $0x108] sm:$0xff]
    %v112 = vld [vmem:[#allocation3 + $0x110] sm:$0xff]
    %v113 = vld [vmem:[#allocation3 + $0x118] sm:$0xff]
    %v114 = vld [vmem:[#allocation3 + $0x120] sm:$0xff]
    %v115 = vld [vmem:[#allocation3 + $0x128] sm:$0xff]
    %v116 = vld [vmem:[#allocation3 + $0x130] sm:$0xff]
    %v117 = vld [vmem:[#allocation3 + $0x138] sm:$0xff]
    %v118 = vld [vmem:[#allocation3 + $0x140] sm:$0xff]
    %v119 = vld [vmem:[#allocation3 + $0x148] sm:$0xff]
    %v120 = vld [vmem:[#allocation3 + $0x150] sm:$0xff]
    %v121 = vld [vmem:[#allocation3 + $0x158] sm:$0xff]
    %v122 = vld [vmem:[#allocation3 + $0x160] sm:$0xff]
    %v123 = vld [vmem:[#allocation3 + $0x168] sm:$0xff]
    %v124 = vld [vmem:[#allocation3 + $0x170] sm:$0xff]
    %v125 = vld [vmem:[#allocation3 + $0x178] sm:$0xff]
    %v126 = vld [vmem:[#allocation3 + $0x180] sm:$0xff]
    %v127 = vld [vmem:[#allocation3 + $0x188] sm:$0xff]
    %v128 = vld [vmem:[#allocation3 + $0x190] sm:$0xff]
    %v129 = vld [vmem:[#allocation3 + $0x198] sm:$0xff]
    %v130 = vld [vmem:[#allocation3 + $0x1a0] sm:$0xff]
    %v131 = vld [vmem:[#allocation3 + $0x1a8] sm:$0xff]
    %v132 = vld [vmem:[#allocation3 + $0x1b0] sm:$0xff]
    %v133 = vld [vmem:[#allocation3 + $0x1b8] sm:$0xff]
    %v134 = vld [vmem:[#allocation3 + $0x1c0] sm:$0xff]
    %v135 = vld [vmem:[#allocation3 + $0x1c8] sm:$0xff]
    %v136 = vld [vmem:[#allocation3 + $0x1d0] sm:$0xff]
    %v137 = vld [vmem:[#allocation3 + $0x1d8] sm:$0xff]
    %v138 = vld [vmem:[#allocation3 + $0x1e0] sm:$0xff]
    %v139 = vld [vmem:[#allocation3 + $0x1e8] sm:$0xff]
    %v140 = vld [vmem:[#allocation3 + $0x1f0] sm:$0xff]
    %v141 = vld [vmem:[#allocation3 + $0x1f8] sm:$0xff]
    %v142 = vld [vmem:[#allocation3 + $0x200] sm:$0xff]
    %v143 = vld [vmem:[#allocation3 + $0x208] sm:$0xff]
    %v144 = vld [vmem:[#allocation3 + $0x210] sm:$0xff]
    %v145 = vld [vmem:[#allocation3 + $0x218] sm:$0xff]
    %v146 = vld [vmem:[#allocation3 + $0x220] sm:$0xff]
    %v147 = vld [vmem:[#allocation3 + $0x228] sm:$0xff]
    %v148 = vld [vmem:[#allocation3 + $0x230] sm:$0xff]
    %v149 = vld [vmem:[#allocation3 + $0x238] sm:$0xff]
    %v150 = vld [vmem:[#allocation3 + $0x240] sm:$0xff]
    %v151 = vld [vmem:[#allocation3 + $0x248] sm:$0xff]
    %v152 = vld [vmem:[#allocation3 + $0x250] sm:$0xff]
    %v153 = vld [vmem:[#allocation3 + $0x258] sm:$0xff]
    %v154 = vld [vmem:[#allocation3 + $0x260] sm:$0xff]
    %v155 = vld [vmem:[#allocation3 + $0x268] sm:$0xff]
    %v156 = vld [vmem:[#allocation3 + $0x270] sm:$0xff]
    %v157 = vld [vmem:[#allocation3 + $0x278] sm:$0xff]
    %v158 = vld [vmem:[#allocation3 + $0x280] sm:$0xff]
    %v159 = vld [vmem:[#allocation3 + $0x288] sm:$0xff]
    %v160 = vld [vmem:[#allocation3 + $0x290] sm:$0xff]
    %v161 = vld [vmem:[#allocation3 + $0x298] sm:$0xff]
    %v162 = vld [vmem:[#allocation3 + $0x2a0] sm:$0xff]
    %v163 = vld [vmem:[#allocation3 + $0x2a8] sm:$0xff]
    %v164 = vld [vmem:[#allocation3 + $0x2b0] sm:$0xff]
    %v165 = vld [vmem:[#allocation3 + $0x2b8] sm:$0xff]
    %v166 = vld [vmem:[#allocation3 + $0x2c0] sm:$0xff]
    %v167 = vld [vmem:[#allocation3 + $0x2c8] sm:$0xff]
    %v168 = vld [vmem:[#allocation3 + $0x2d0] sm:$0xff]
    %v169 = vld [vmem:[#allocation3 + $0x2d8] sm:$0xff]
    %v170 = vld [vmem:[#allocation3 + $0x2e0] sm:$0xff]
    %v171 = vld [vmem:[#allocation3 + $0x2e8] sm:$0xff]
    %v172 = vld [vmem:[#allocation3 + $0x2f0] sm:$0xff]
    %v173 = vld [vmem:[#allocation3 + $0x2f8] sm:$0xff]
    %v174 = vld [vmem:[#allocation3 + $0x300] sm:$0xff]
    %v175 = vld [vmem:[#allocation3 + $0x308] sm:$0xff]
    %v176 = vld [vmem:[%s2] sm:$0x3]
    %v178 = vlaneseq
    %v179 = vshrl.u32 %v178, 7
    %v180 = vsub.s32 0, %v179
    %v181 = vrot.slane %v176, %v180
    %v182 = vlaneseq
    %v183 = vshrl.u32 %v182, 7
    %v184 = vsub.s32 1, %v183
    %v185 = vrot.slane %v176, %v184
    %v286 = vunpack.c.l.b16 %v78
    %v287 = vunpack.c.h.b16 %v78
    %v288 = vunpack.c.l.b16 %v79
    %v289 = vunpack.c.h.b16 %v79
    %v290 = vunpack.c.l.b16 %v80
    %v291 = vunpack.c.h.b16 %v80
    %v292 = vunpack.c.l.b16 %v81
    %v293 = vunpack.c.h.b16 %v81
    %v294 = vunpack.c.l.b16 %v82
    %v295 = vunpack.c.h.b16 %v82
    %v296 = vunpack.c.l.b16 %v83
    %v297 = vunpack.c.h.b16 %v83
    %v298 = vunpack.c.l.b16 %v84
    %v299 = vunpack.c.h.b16 %v84
    %v300 = vunpack.c.l.b16 %v85
    %v301 = vunpack.c.h.b16 %v85
    %v302 = vunpack.c.l.b16 %v86
    %v303 = vunpack.c.h.b16 %v86
    %v304 = vunpack.c.l.b16 %v87
    %v305 = vunpack.c.h.b16 %v87
    %v306 = vunpack.c.l.b16 %v88
    %v307 = vunpack.c.h.b16 %v88
    %v308 = vunpack.c.l.b16 %v89
    %v309 = vunpack.c.h.b16 %v89
    %v310 = vunpack.c.l.b16 %v90
    %v311 = vunpack.c.h.b16 %v90
    %v312 = vunpack.c.l.b16 %v91
    %v313 = vunpack.c.h.b16 %v91
    %v314 = vunpack.c.l.b16 %v92
    %v315 = vunpack.c.h.b16 %v92
    %v316 = vunpack.c.l.b16 %v93
    %v317 = vunpack.c.h.b16 %v93
    %v318 = vunpack.c.l.b16 %v94
    %v319 = vunpack.c.h.b16 %v94
    %v320 = vunpack.c.l.b16 %v95
    %v321 = vunpack.c.h.b16 %v95
    %v322 = vunpack.c.l.b16 %v96
    %v323 = vunpack.c.h.b16 %v96
    %v324 = vunpack.c.l.b16 %v97
    %v325 = vunpack.c.h.b16 %v97
    %v326 = vunpack.c.l.b16 %v98
    %v327 = vunpack.c.h.b16 %v98
    %v328 = vunpack.c.l.b16 %v99
    %v329 = vunpack.c.h.b16 %v99
    %v330 = vunpack.c.l.b16 %v100
    %v331 = vunpack.c.h.b16 %v100
    %v332 = vunpack.c.l.b16 %v101
    %v333 = vunpack.c.h.b16 %v101
    %v334 = vunpack.c.l.b16 %v102
    %v335 = vunpack.c.h.b16 %v102
    %v336 = vunpack.c.l.b16 %v103
    %v337 = vunpack.c.h.b16 %v103
    %v338 = vunpack.c.l.b16 %v104
    %v339 = vunpack.c.h.b16 %v104
    %v340 = vunpack.c.l.b16 %v105
    %v341 = vunpack.c.h.b16 %v105
    %v342 = vunpack.c.l.b16 %v106
    %v343 = vunpack.c.h.b16 %v106
    %v344 = vunpack.c.l.b16 %v107
    %v345 = vunpack.c.h.b16 %v107
    %v346 = vunpack.c.l.b16 %v108
    %v347 = vunpack.c.h.b16 %v108
    %v348 = vunpack.c.l.b16 %v109
    %v349 = vunpack.c.h.b16 %v109
    %v350 = vunpack.c.l.b16 %v110
    %v351 = vunpack.c.h.b16 %v110
    %v352 = vunpack.c.l.b16 %v111
    %v353 = vunpack.c.h.b16 %v111
    %v354 = vunpack.c.l.b16 %v112
    %v355 = vunpack.c.h.b16 %v112
    %v356 = vunpack.c.l.b16 %v113
    %v357 = vunpack.c.h.b16 %v113
    %v358 = vunpack.c.l.b16 %v114
    %v359 = vunpack.c.h.b16 %v114
    %v360 = vunpack.c.l.b16 %v115
    %v361 = vunpack.c.h.b16 %v115
    %v362 = vunpack.c.l.b16 %v116
    %v363 = vunpack.c.h.b16 %v116
    %v364 = vunpack.c.l.b16 %v117
    %v365 = vunpack.c.h.b16 %v117
    %v366 = vunpack.c.l.b16 %v118
    %v367 = vunpack.c.h.b16 %v118
    %v368 = vunpack.c.l.b16 %v119
    %v369 = vunpack.c.h.b16 %v119
    %v370 = vunpack.c.l.b16 %v120
    %v371 = vunpack.c.h.b16 %v120
    %v372 = vunpack.c.l.b16 %v121
    %v373 = vunpack.c.h.b16 %v121
    %v374 = vunpack.c.l.b16 %v122
    %v375 = vunpack.c.h.b16 %v122
    %v376 = vunpack.c.l.b16 %v123
    %v377 = vunpack.c.h.b16 %v123
    %v378 = vunpack.c.l.b16 %v124
    %v379 = vunpack.c.h.b16 %v124
    %v380 = vunpack.c.l.b16 %v125
    %v381 = vunpack.c.h.b16 %v125
    %v382 = vunpack.c.l.b16 %v126
    %v383 = vunpack.c.h.b16 %v126
    %v384 = vunpack.c.l.b16 %v127
    %v385 = vunpack.c.h.b16 %v127
    %v386 = vunpack.c.l.b16 %v128
    %v387 = vunpack.c.h.b16 %v128
    %v388 = vunpack.c.l.b16 %v129
    %v389 = vunpack.c.h.b16 %v129
    %v390 = vunpack.c.l.b16 %v130
    %v391 = vunpack.c.h.b16 %v130
    %v392 = vunpack.c.l.b16 %v131
    %v393 = vunpack.c.h.b16 %v131
    %v394 = vunpack.c.l.b16 %v132
    %v395 = vunpack.c.h.b16 %v132
    %v396 = vunpack.c.l.b16 %v133
    %v397 = vunpack.c.h.b16 %v133
    %v398 = vunpack.c.l.b16 %v134
    %v399 = vunpack.c.h.b16 %v134
    %v400 = vunpack.c.l.b16 %v135
    %v401 = vunpack.c.h.b16 %v135
    %v402 = vunpack.c.l.b16 %v136
    %v403 = vunpack.c.h.b16 %v136
    %v404 = vunpack.c.l.b16 %v137
    %v405 = vunpack.c.h.b16 %v137
    %v406 = vunpack.c.l.b16 %v138
    %v407 = vunpack.c.h.b16 %v138
    %v408 = vunpack.c.l.b16 %v139
    %v409 = vunpack.c.h.b16 %v139
    %v410 = vunpack.c.l.b16 %v140
    %v411 = vunpack.c.h.b16 %v140
    %v412 = vunpack.c.l.b16 %v141
    %v413 = vunpack.c.h.b16 %v141
    %v414 = vunpack.c.l.b16 %v142
    %v415 = vunpack.c.h.b16 %v142
    %v416 = vunpack.c.l.b16 %v143
    %v417 = vunpack.c.h.b16 %v143
    %v418 = vunpack.c.l.b16 %v144
    %v419 = vunpack.c.h.b16 %v144
    %v420 = vunpack.c.l.b16 %v145
    %v421 = vunpack.c.h.b16 %v145
    %v422 = vunpack.c.l.b16 %v146
    %v423 = vunpack.c.h.b16 %v146
    %v424 = vunpack.c.l.b16 %v147
    %v425 = vunpack.c.h.b16 %v147
    %v426 = vunpack.c.l.b16 %v148
    %v427 = vunpack.c.h.b16 %v148
    %v428 = vunpack.c.l.b16 %v149
    %v429 = vunpack.c.h.b16 %v149
    %v430 = vunpack.c.l.b16 %v150
    %v431 = vunpack.c.h.b16 %v150
    %v432 = vunpack.c.l.b16 %v151
    %v433 = vunpack.c.h.b16 %v151
    %v434 = vunpack.c.l.b16 %v152
    %v435 = vunpack.c.h.b16 %v152
    %v436 = vunpack.c.l.b16 %v153
    %v437 = vunpack.c.h.b16 %v153
    %v438 = vunpack.c.l.b16 %v154
    %v439 = vunpack.c.h.b16 %v154
    %v440 = vunpack.c.l.b16 %v155
    %v441 = vunpack.c.h.b16 %v155
    %v442 = vunpack.c.l.b16 %v156
    %v443 = vunpack.c.h.b16 %v156
    %v444 = vunpack.c.l.b16 %v157
    %v445 = vunpack.c.h.b16 %v157
    %v446 = vunpack.c.l.b16 %v158
    %v447 = vunpack.c.h.b16 %v158
    %v448 = vunpack.c.l.b16 %v159
    %v449 = vunpack.c.h.b16 %v159
    %v450 = vunpack.c.l.b16 %v160
    %v451 = vunpack.c.h.b16 %v160
    %v452 = vunpack.c.l.b16 %v161
    %v453 = vunpack.c.h.b16 %v161
    %v454 = vunpack.c.l.b16 %v162
    %v455 = vunpack.c.h.b16 %v162
    %v456 = vunpack.c.l.b16 %v163
    %v457 = vunpack.c.h.b16 %v163
    %v458 = vunpack.c.l.b16 %v164
    %v459 = vunpack.c.h.b16 %v164
    %v460 = vunpack.c.l.b16 %v165
    %v461 = vunpack.c.h.b16 %v165
    %v462 = vunpack.c.l.b16 %v166
    %v463 = vunpack.c.h.b16 %v166
    %v464 = vunpack.c.l.b16 %v167
    %v465 = vunpack.c.h.b16 %v167
    %v466 = vunpack.c.l.b16 %v168
    %v467 = vunpack.c.h.b16 %v168
    %v468 = vunpack.c.l.b16 %v169
    %v469 = vunpack.c.h.b16 %v169
    %v470 = vunpack.c.l.b16 %v170
    %v471 = vunpack.c.h.b16 %v170
    %v472 = vunpack.c.l.b16 %v171
    %v473 = vunpack.c.h.b16 %v171
    %v474 = vunpack.c.l.b16 %v172
    %v475 = vunpack.c.h.b16 %v172
    %v476 = vunpack.c.l.b16 %v173
    %v477 = vunpack.c.h.b16 %v173
    %v478 = vunpack.c.l.b16 %v174
    %v479 = vunpack.c.h.b16 %v174
    %v480 = vunpack.c.l.b16 %v175
    %v481 = vunpack.c.h.b16 %v175
    %v482 = vpack.c.b16 %v288, %v286
    %v483 = vpack.c.b16 %v289, %v287
    %v484 = vpack.c.b16 %v292, %v290
    %v485 = vpack.c.b16 %v293, %v291
    %v486 = vpack.c.b16 %v296, %v294
    %v487 = vpack.c.b16 %v297, %v295
    %v488 = vpack.c.b16 %v300, %v298
    %v489 = vpack.c.b16 %v301, %v299
    %v490 = vpack.c.b16 %v304, %v302
    %v491 = vpack.c.b16 %v305, %v303
    %v492 = vpack.c.b16 %v308, %v306
    %v493 = vpack.c.b16 %v309, %v307
    %v494 = vpack.c.b16 %v312, %v310
    %v495 = vpack.c.b16 %v313, %v311
    %v496 = vpack.c.b16 %v316, %v314
    %v497 = vpack.c.b16 %v317, %v315
    %v498 = vpack.c.b16 %v320, %v318
    %v499 = vpack.c.b16 %v321, %v319
    %v500 = vpack.c.b16 %v324, %v322
    %v501 = vpack.c.b16 %v325, %v323
    %v502 = vpack.c.b16 %v328, %v326
    %v503 = vpack.c.b16 %v329, %v327
    %v504 = vpack.c.b16 %v332, %v330
    %v505 = vpack.c.b16 %v333, %v331
    %v506 = vpack.c.b16 %v336, %v334
    %v507 = vpack.c.b16 %v337, %v335
    %v508 = vpack.c.b16 %v340, %v338
    %v509 = vpack.c.b16 %v341, %v339
    %v510 = vpack.c.b16 %v344, %v342
    %v511 = vpack.c.b16 %v345, %v343
    %v512 = vpack.c.b16 %v348, %v346
    %v513 = vpack.c.b16 %v349, %v347
    %v514 = vpack.c.b16 %v352, %v350
    %v515 = vpack.c.b16 %v353, %v351
    %v516 = vpack.c.b16 %v356, %v354
    %v517 = vpack.c.b16 %v357, %v355
    %v518 = vpack.c.b16 %v360, %v358
    %v519 = vpack.c.b16 %v361, %v359
    %v520 = vpack.c.b16 %v364, %v362
    %v521 = vpack.c.b16 %v365, %v363
    %v522 = vpack.c.b16 %v368, %v366
    %v523 = vpack.c.b16 %v369, %v367
    %v524 = vpack.c.b16 %v372, %v370
    %v525 = vpack.c.b16 %v373, %v371
    %v526 = vpack.c.b16 %v376, %v374
    %v527 = vpack.c.b16 %v377, %v375
    %v528 = vpack.c.b16 %v380, %v378
    %v529 = vpack.c.b16 %v381, %v379
    %v530 = vpack.c.b16 %v384, %v382
    %v531 = vpack.c.b16 %v385, %v383
    %v532 = vpack.c.b16 %v388, %v386
    %v533 = vpack.c.b16 %v389, %v387
    %v534 = vpack.c.b16 %v392, %v390
    %v535 = vpack.c.b16 %v393, %v391
    %v536 = vpack.c.b16 %v396, %v394
    %v537 = vpack.c.b16 %v397, %v395
    %v538 = vpack.c.b16 %v400, %v398
    %v539 = vpack.c.b16 %v401, %v399
    %v540 = vpack.c.b16 %v404, %v402
    %v541 = vpack.c.b16 %v405, %v403
    %v542 = vpack.c.b16 %v408, %v406
    %v543 = vpack.c.b16 %v409, %v407
    %v544 = vpack.c.b16 %v412, %v410
    %v545 = vpack.c.b16 %v413, %v411
    %v546 = vpack.c.b16 %v416, %v414
    %v547 = vpack.c.b16 %v417, %v415
    %v548 = vpack.c.b16 %v420, %v418
    %v549 = vpack.c.b16 %v421, %v419
    %v550 = vpack.c.b16 %v424, %v422
    %v551 = vpack.c.b16 %v425, %v423
    %v552 = vpack.c.b16 %v428, %v426
    %v553 = vpack.c.b16 %v429, %v427
    %v554 = vpack.c.b16 %v432, %v430
    %v555 = vpack.c.b16 %v433, %v431
    %v556 = vpack.c.b16 %v436, %v434
    %v557 = vpack.c.b16 %v437, %v435
    %v558 = vpack.c.b16 %v440, %v438
    %v559 = vpack.c.b16 %v441, %v439
    %v560 = vpack.c.b16 %v444, %v442
    %v561 = vpack.c.b16 %v445, %v443
    %v562 = vpack.c.b16 %v448, %v446
    %v563 = vpack.c.b16 %v449, %v447
    %v564 = vpack.c.b16 %v452, %v450
    %v565 = vpack.c.b16 %v453, %v451
    %v566 = vpack.c.b16 %v456, %v454
    %v567 = vpack.c.b16 %v457, %v455
    %v568 = vpack.c.b16 %v460, %v458
    %v569 = vpack.c.b16 %v461, %v459
    %v570 = vpack.c.b16 %v464, %v462
    %v571 = vpack.c.b16 %v465, %v463
    %v572 = vpack.c.b16 %v468, %v466
    %v573 = vpack.c.b16 %v469, %v467
    %v574 = vpack.c.b16 %v472, %v470
    %v575 = vpack.c.b16 %v473, %v471
    %v576 = vpack.c.b16 %v476, %v474
    %v577 = vpack.c.b16 %v477, %v475
    %v578 = vpack.c.b16 %v480, %v478
    %v579 = vpack.c.b16 %v481, %v479
    %vm678 = vcmask 130048
    %v680 = vsel %vm678, %v77, 0
    %682 = vmatprep.subr.bf16.mxu0 %v483
    %683 = vmatpush1.bf16.msra.mxu0 %v482
    %684 = vmatprep.subr.bf16.mxu0 %v485
    %685 = vmatpush1.bf16.msra.mxu0 %v484
    %686 = vmatprep.subr.bf16.mxu0 %v487
    %687 = vmatpush1.bf16.msra.mxu0 %v486
    %688 = vmatprep.subr.bf16.mxu0 %v489
    %689 = vmatpush1.bf16.msra.mxu0 %v488
    %690 = vmatprep.subr.bf16.mxu0 %v491
    %691 = vmatpush1.bf16.msra.mxu0 %v490
    %692 = vmatprep.subr.bf16.mxu0 %v493
    %693 = vmatpush1.bf16.msra.mxu0 %v492
    %694 = vmatprep.subr.bf16.mxu0 %v495
    %695 = vmatpush1.bf16.msra.mxu0 %v494
    %696 = vmatprep.subr.bf16.mxu0 %v497
    %697 = vmatpush1.bf16.msra.mxu0 %v496
    %698 = vmatprep.subr.bf16.mxu0 %v499
    %699 = vmatpush1.bf16.msra.mxu0 %v498
    %700 = vmatprep.subr.bf16.mxu0 %v501
    %701 = vmatpush1.bf16.msra.mxu0 %v500
    %702 = vmatprep.subr.bf16.mxu0 %v503
    %703 = vmatpush1.bf16.msra.mxu0 %v502
    %704 = vmatprep.subr.bf16.mxu0 %v505
    %705 = vmatpush1.bf16.msra.mxu0 %v504
    %706 = vmatprep.subr.bf16.mxu0 %v507
    %707 = vmatpush1.bf16.msra.mxu0 %v506
    %708 = vmatprep.subr.bf16.mxu0 %v509
    %709 = vmatpush1.bf16.msra.mxu0 %v508
    %710 = vmatprep.subr.bf16.mxu0 %v511
    %711 = vmatpush1.bf16.msra.mxu0 %v510
    %712 = vmatprep.subr.bf16.mxu0 %v513
    %713 = vmatpush1.bf16.msra.mxu0 %v512
    %714 = vmatprep.mubr.bf16.mxu0 %v72
    %715 = vmatmul.mubr.bf16.gmra.mrb[0].mxu0 %v71
    %v716 = vpop.f32.mrb[0].mxu0
    %v717 = vadd.f32 %v181, %v716
    %v718 = vpop.f32.mrb[0].mxu0
    %v719 = vadd.f32 %v185, %v718
    %v720 = vpop.f32.mrb[0].mxu0
    %v721 = vadd.f32 %v181, %v720
    %v722 = vpop.f32.mrb[0].mxu0
    %v723 = vadd.f32 %v185, %v722
    %724 = vdwg.mxu0
    %725 = vmatprep.subr.bf16.mxu0 %v515
    %726 = vmatpush1.bf16.msra.mxu0 %v514
    %727 = vmatprep.subr.bf16.mxu0 %v517
    %728 = vmatpush1.bf16.msra.mxu0 %v516
    %729 = vmatprep.subr.bf16.mxu0 %v519
    %730 = vmatpush1.bf16.msra.mxu0 %v518
    %731 = vmatprep.subr.bf16.mxu0 %v521
    %732 = vmatpush1.bf16.msra.mxu0 %v520
    %733 = vmatprep.subr.bf16.mxu0 %v523
    %734 = vmatpush1.bf16.msra.mxu0 %v522
    %735 = vmatprep.subr.bf16.mxu0 %v525
    %736 = vmatpush1.bf16.msra.mxu0 %v524
    %737 = vmatprep.subr.bf16.mxu0 %v527
    %738 = vmatpush1.bf16.msra.mxu0 %v526
    %739 = vmatprep.subr.bf16.mxu0 %v529
    %740 = vmatpush1.bf16.msra.mxu0 %v528
    %741 = vmatprep.subr.bf16.mxu0 %v531
    %742 = vmatpush1.bf16.msra.mxu0 %v530
    %743 = vmatprep.subr.bf16.mxu0 %v533
    %744 = vmatpush1.bf16.msra.mxu0 %v532
    %745 = vmatprep.subr.bf16.mxu0 %v535
    %746 = vmatpush1.bf16.msra.mxu0 %v534
    %747 = vmatprep.subr.bf16.mxu0 %v537
    %748 = vmatpush1.bf16.msra.mxu0 %v536
    %749 = vmatprep.subr.bf16.mxu0 %v539
    %750 = vmatpush1.bf16.msra.mxu0 %v538
    %751 = vmatprep.subr.bf16.mxu0 %v541
    %752 = vmatpush1.bf16.msra.mxu0 %v540
    %753 = vmatprep.subr.bf16.mxu0 %v543
    %754 = vmatpush1.bf16.msra.mxu0 %v542
    %755 = vmatprep.subr.bf16.mxu0 %v545
    %756 = vmatpush1.bf16.msra.mxu0 %v544
    %757 = vmatprep.mubr.bf16.mxu0 %v74
    %758 = vmatmul.mubr.bf16.gmra.mrb[0].mxu0 %v73
    %v759 = vpop.f32.mrb[0].mxu0
    %v760 = vadd.f32 %v717, %v759
    %v761 = vpop.f32.mrb[0].mxu0
    %v762 = vadd.f32 %v719, %v761
    %v763 = vpop.f32.mrb[0].mxu0
    %v764 = vadd.f32 %v721, %v763
    %v765 = vpop.f32.mrb[0].mxu0
    %v766 = vadd.f32 %v723, %v765
    %767 = vdwg.mxu0
    %768 = vmatprep.subr.bf16.mxu0 %v547
    %769 = vmatpush1.bf16.msra.mxu0 %v546
    %770 = vmatprep.subr.bf16.mxu0 %v549
    %771 = vmatpush1.bf16.msra.mxu0 %v548
    %772 = vmatprep.subr.bf16.mxu0 %v551
    %773 = vmatpush1.bf16.msra.mxu0 %v550
    %774 = vmatprep.subr.bf16.mxu0 %v553
    %775 = vmatpush1.bf16.msra.mxu0 %v552
    %776 = vmatprep.subr.bf16.mxu0 %v555
    %777 = vmatpush1.bf16.msra.mxu0 %v554
    %778 = vmatprep.subr.bf16.mxu0 %v557
    %779 = vmatpush1.bf16.msra.mxu0 %v556
    %780 = vmatprep.subr.bf16.mxu0 %v559
    %781 = vmatpush1.bf16.msra.mxu0 %v558
    %782 = vmatprep.subr.bf16.mxu0 %v561
    %783 = vmatpush1.bf16.msra.mxu0 %v560
    %784 = vmatprep.subr.bf16.mxu0 %v563
    %785 = vmatpush1.bf16.msra.mxu0 %v562
    %786 = vmatprep.subr.bf16.mxu0 %v565
    %787 = vmatpush1.bf16.msra.mxu0 %v564
    %788 = vmatprep.subr.bf16.mxu0 %v567
    %789 = vmatpush1.bf16.msra.mxu0 %v566
    %790 = vmatprep.subr.bf16.mxu0 %v569
    %791 = vmatpush1.bf16.msra.mxu0 %v568
    %792 = vmatprep.subr.bf16.mxu0 %v571
    %793 = vmatpush1.bf16.msra.mxu0 %v570
    %794 = vmatprep.subr.bf16.mxu0 %v573
    %795 = vmatpush1.bf16.msra.mxu0 %v572
    %796 = vmatprep.subr.bf16.mxu0 %v575
    %797 = vmatpush1.bf16.msra.mxu0 %v574
    %798 = vmatprep.subr.bf16.mxu0 %v577
    %799 = vmatpush1.bf16.msra.mxu0 %v576
    %800 = vmatprep.mubr.bf16.mxu0 %v76
    %801 = vmatmul.mubr.bf16.gmra.mrb[0].mxu0 %v75
    %v802 = vpop.f32.mrb[0].mxu0
    %v803 = vadd.f32 %v760, %v802
    %v804 = vpop.f32.mrb[0].mxu0
    %v805 = vadd.f32 %v762, %v804
    %v806 = vpop.f32.mrb[0].mxu0
    %v807 = vadd.f32 %v764, %v806
    %v808 = vpop.f32.mrb[0].mxu0
    %v809 = vadd.f32 %v766, %v808
    %810 = vdwg.mxu0
    %811 = vmatprep.subr.bf16.mxu0 %v579
    %812 = vmatpush1.bf16.msra.mxu0 %v578
    %813 = vmatprep.subr.bf16.mxu0 0
    %814 = vmatpush1.bf16.msra.mxu0 0
    %815 = vmatprep.subr.bf16.mxu0 0
    %816 = vmatpush1.bf16.msra.mxu0 0
    %817 = vmatprep.subr.bf16.mxu0 0
    %818 = vmatpush1.bf16.msra.mxu0 0
    %819 = vmatprep.subr.bf16.mxu0 0
    %820 = vmatpush1.bf16.msra.mxu0 0
    %821 = vmatprep.subr.bf16.mxu0 0
    %822 = vmatpush1.bf16.msra.mxu0 0
    %823 = vmatprep.subr.bf16.mxu0 0
    %824 = vmatpush1.bf16.msra.mxu0 0
    %825 = vmatprep.subr.bf16.mxu0 0
    %826 = vmatpush1.bf16.msra.mxu0 0
    %827 = vmatprep.subr.bf16.mxu0 0
    %828 = vmatpush1.bf16.msra.mxu0 0
    %829 = vmatprep.subr.bf16.mxu0 0
    %830 = vmatpush1.bf16.msra.mxu0 0
    %831 = vmatprep.subr.bf16.mxu0 0
    %832 = vmatpush1.bf16.msra.mxu0 0
    %833 = vmatprep.subr.bf16.mxu0 0
    %834 = vmatpush1.bf16.msra.mxu0 0
    %835 = vmatprep.subr.bf16.mxu0 0
    %836 = vmatpush1.bf16.msra.mxu0 0
    %837 = vmatprep.subr.bf16.mxu0 0
    %838 = vmatpush1.bf16.msra.mxu0 0
    %839 = vmatprep.subr.bf16.mxu0 0
    %840 = vmatpush1.bf16.msra.mxu0 0
    %841 = vmatprep.subr.bf16.mxu0 0
    %842 = vmatpush1.bf16.msra.mxu0 0
    %843 = vmatprep.mubr.bf16.mxu0 0
    %844 = vmatmul.mubr.bf16.gmra.mrb[0].mxu0 %v680
    %v845 = vpop.f32.mrb[0].mxu0
    %v846 = vadd.f32 %v803, %v845
    %v847 = vpop.f32.mrb[0].mxu0
    %v848 = vadd.f32 %v805, %v847
    %v849 = vpop.f32.mrb[0].mxu0
    %v850 = vadd.f32 %v807, %v849
    %v851 = vpop.f32.mrb[0].mxu0
    %v852 = vadd.f32 %v809, %v851
    %853 = vdwg.mxu0
    %vm854 = vcmp.gt.f32.partialorder %v846, 0.0
    %vm855 = vcmp.gt.f32.partialorder %v848, 0.0
    %vm856 = vcmp.gt.f32.partialorder %v850, 0.0
    %vm857 = vcmp.gt.f32.partialorder %v852, 0.0
    %v858 = vmul.f32 %v846, 0.01
    %v859 = vmul.f32 %v848, 0.01
    %v860 = vmul.f32 %v850, 0.01
    %v861 = vmul.f32 %v852, 0.01
    %v862 = vsel %vm854, %v846, %v858
    %v863 = vsel %vm855, %v848, %v859
    %v864 = vsel %vm856, %v850, %v860
    %v865 = vsel %vm857, %v852, %v861
    %v866 = vpack.c.bf16 %v864, %v862
    %v867 = vpack.c.bf16 %v865, %v863
    %v868 = vld [vmem:[#allocation5] sm:$0xff]
    %v869 = vld [vmem:[#allocation5 + $0x8] sm:$0xff]
    %v870 = vld [vmem:[#allocation5 + $0x10] sm:$0xff]
    %v871 = vld [vmem:[#allocation5 + $0x18] sm:$0xff]
    %v872 = vld [vmem:[#allocation5 + $0x20] sm:$0xff]
    %v873 = vld [vmem:[#allocation5 + $0x28] sm:$0xff]
    %v874 = vld [vmem:[#allocation5 + $0x30] sm:$0xff]
    %v875 = vld [vmem:[#allocation5 + $0x38] sm:$0xff]
    %v876 = vld [vmem:[#allocation5 + $0x40] sm:$0xff]
    %v877 = vld [vmem:[#allocation5 + $0x48] sm:$0xff]
    %v878 = vld [vmem:[#allocation5 + $0x50] sm:$0xff]
    %v879 = vld [vmem:[#allocation5 + $0x58] sm:$0xff]
    %v880 = vld [vmem:[#allocation5 + $0x60] sm:$0xff]
    %v881 = vld [vmem:[#allocation5 + $0x68] sm:$0xff]
    %v882 = vld [vmem:[#allocation5 + $0x70] sm:$0xff]
    %v883 = vld [vmem:[#allocation5 + $0x78] sm:$0xff]
    %v884 = vld [vmem:[#allocation5 + $0x80] sm:$0xff]
    %v885 = vld [vmem:[#allocation5 + $0x88] sm:$0xff]
    %v886 = vld [vmem:[#allocation5 + $0x90] sm:$0xff]
    %v887 = vld [vmem:[#allocation5 + $0x98] sm:$0xff]
    %v888 = vld [vmem:[#allocation5 + $0xa0] sm:$0xff]
    %v889 = vld [vmem:[#allocation5 + $0xa8] sm:$0xff]
    %v890 = vld [vmem:[#allocation5 + $0xb0] sm:$0xff]
    %v891 = vld [vmem:[#allocation5 + $0xb8] sm:$0xff]
    %v892 = vld [vmem:[#allocation5 + $0xc0] sm:$0xff]
    %v893 = vld [vmem:[#allocation5 + $0xc8] sm:$0xff]
    %v894 = vld [vmem:[#allocation5 + $0xd0] sm:$0xff]
    %v895 = vld [vmem:[#allocation5 + $0xd8] sm:$0xff]
    %v896 = vld [vmem:[#allocation5 + $0xe0] sm:$0xff]
    %v897 = vld [vmem:[#allocation5 + $0xe8] sm:$0xff]
    %v898 = vld [vmem:[#allocation5 + $0xf0] sm:$0xff]
    %v899 = vld [vmem:[#allocation5 + $0xf8] sm:$0xff]
    %v900 = vld [vmem:[%s4] sm:$0x3]
    %v902 = vlaneseq
    %v903 = vshrl.u32 %v902, 7
    %v904 = vsub.s32 0, %v903
    %v905 = vrot.slane %v900, %v904
    %v906 = vlaneseq
    %v907 = vshrl.u32 %v906, 7
    %v908 = vsub.s32 1, %v907
    %v909 = vrot.slane %v900, %v908
    %v944 = vunpack.c.l.b16 %v868
    %v945 = vunpack.c.h.b16 %v868
    %v946 = vunpack.c.l.b16 %v869
    %v947 = vunpack.c.h.b16 %v869
    %v948 = vunpack.c.l.b16 %v870
    %v949 = vunpack.c.h.b16 %v870
    %v950 = vunpack.c.l.b16 %v871
    %v951 = vunpack.c.h.b16 %v871
    %v952 = vunpack.c.l.b16 %v872
    %v953 = vunpack.c.h.b16 %v872
    %v954 = vunpack.c.l.b16 %v873
    %v955 = vunpack.c.h.b16 %v873
    %v956 = vunpack.c.l.b16 %v874
    %v957 = vunpack.c.h.b16 %v874
    %v958 = vunpack.c.l.b16 %v875
    %v959 = vunpack.c.h.b16 %v875
    %v960 = vunpack.c.l.b16 %v876
    %v961 = vunpack.c.h.b16 %v876
    %v962 = vunpack.c.l.b16 %v877
    %v963 = vunpack.c.h.b16 %v877
    %v964 = vunpack.c.l.b16 %v878
    %v965 = vunpack.c.h.b16 %v878
    %v966 = vunpack.c.l.b16 %v879
    %v967 = vunpack.c.h.b16 %v879
    %v968 = vunpack.c.l.b16 %v880
    %v969 = vunpack.c.h.b16 %v880
    %v970 = vunpack.c.l.b16 %v881
    %v971 = vunpack.c.h.b16 %v881
    %v972 = vunpack.c.l.b16 %v882
    %v973 = vunpack.c.h.b16 %v882
    %v974 = vunpack.c.l.b16 %v883
    %v975 = vunpack.c.h.b16 %v883
    %v976 = vunpack.c.l.b16 %v884
    %v977 = vunpack.c.h.b16 %v884
    %v978 = vunpack.c.l.b16 %v885
    %v979 = vunpack.c.h.b16 %v885
    %v980 = vunpack.c.l.b16 %v886
    %v981 = vunpack.c.h.b16 %v886
    %v982 = vunpack.c.l.b16 %v887
    %v983 = vunpack.c.h.b16 %v887
    %v984 = vunpack.c.l.b16 %v888
    %v985 = vunpack.c.h.b16 %v888
    %v986 = vunpack.c.l.b16 %v889
    %v987 = vunpack.c.h.b16 %v889
    %v988 = vunpack.c.l.b16 %v890
    %v989 = vunpack.c.h.b16 %v890
    %v990 = vunpack.c.l.b16 %v891
    %v991 = vunpack.c.h.b16 %v891
    %v992 = vunpack.c.l.b16 %v892
    %v993 = vunpack.c.h.b16 %v892
    %v994 = vunpack.c.l.b16 %v893
    %v995 = vunpack.c.h.b16 %v893
    %v996 = vunpack.c.l.b16 %v894
    %v997 = vunpack.c.h.b16 %v894
    %v998 = vunpack.c.l.b16 %v895
    %v999 = vunpack.c.h.b16 %v895
    %v1000 = vunpack.c.l.b16 %v896
    %v1001 = vunpack.c.h.b16 %v896
    %v1002 = vunpack.c.l.b16 %v897
    %v1003 = vunpack.c.h.b16 %v897
    %v1004 = vunpack.c.l.b16 %v898
    %v1005 = vunpack.c.h.b16 %v898
    %v1006 = vunpack.c.l.b16 %v899
    %v1007 = vunpack.c.h.b16 %v899
    %v1008 = vpack.c.b16 %v946, %v944
    %v1009 = vpack.c.b16 %v947, %v945
    %v1010 = vpack.c.b16 %v950, %v948
    %v1011 = vpack.c.b16 %v951, %v949
    %v1012 = vpack.c.b16 %v954, %v952
    %v1013 = vpack.c.b16 %v955, %v953
    %v1014 = vpack.c.b16 %v958, %v956
    %v1015 = vpack.c.b16 %v959, %v957
    %v1016 = vpack.c.b16 %v962, %v960
    %v1017 = vpack.c.b16 %v963, %v961
    %v1018 = vpack.c.b16 %v966, %v964
    %v1019 = vpack.c.b16 %v967, %v965
    %v1020 = vpack.c.b16 %v970, %v968
    %v1021 = vpack.c.b16 %v971, %v969
    %v1022 = vpack.c.b16 %v974, %v972
    %v1023 = vpack.c.b16 %v975, %v973
    %v1024 = vpack.c.b16 %v978, %v976
    %v1025 = vpack.c.b16 %v979, %v977
    %v1026 = vpack.c.b16 %v982, %v980
    %v1027 = vpack.c.b16 %v983, %v981
    %v1028 = vpack.c.b16 %v986, %v984
    %v1029 = vpack.c.b16 %v987, %v985
    %v1030 = vpack.c.b16 %v990, %v988
    %v1031 = vpack.c.b16 %v991, %v989
    %v1032 = vpack.c.b16 %v994, %v992
    %v1033 = vpack.c.b16 %v995, %v993
    %v1034 = vpack.c.b16 %v998, %v996
    %v1035 = vpack.c.b16 %v999, %v997
    %v1036 = vpack.c.b16 %v1002, %v1000
    %v1037 = vpack.c.b16 %v1003, %v1001
    %v1038 = vpack.c.b16 %v1006, %v1004
    %v1039 = vpack.c.b16 %v1007, %v1005
    %1072 = vmatprep.subr.bf16.mxu0 %v1009
    %1073 = vmatpush1.bf16.msra.mxu0 %v1008
    %1074 = vmatprep.subr.bf16.mxu0 %v1011
    %1075 = vmatpush1.bf16.msra.mxu0 %v1010
    %1076 = vmatprep.subr.bf16.mxu0 %v1013
    %1077 = vmatpush1.bf16.msra.mxu0 %v1012
    %1078 = vmatprep.subr.bf16.mxu0 %v1015
    %1079 = vmatpush1.bf16.msra.mxu0 %v1014
    %1080 = vmatprep.subr.bf16.mxu0 %v1017
    %1081 = vmatpush1.bf16.msra.mxu0 %v1016
    %1082 = vmatprep.subr.bf16.mxu0 %v1019
    %1083 = vmatpush1.bf16.msra.mxu0 %v1018
    %1084 = vmatprep.subr.bf16.mxu0 %v1021
    %1085 = vmatpush1.bf16.msra.mxu0 %v1020
    %1086 = vmatprep.subr.bf16.mxu0 %v1023
    %1087 = vmatpush1.bf16.msra.mxu0 %v1022
    %1088 = vmatprep.subr.bf16.mxu0 %v1025
    %1089 = vmatpush1.bf16.msra.mxu0 %v1024
    %1090 = vmatprep.subr.bf16.mxu0 %v1027
    %1091 = vmatpush1.bf16.msra.mxu0 %v1026
    %1092 = vmatprep.subr.bf16.mxu0 %v1029
    %1093 = vmatpush1.bf16.msra.mxu0 %v1028
    %1094 = vmatprep.subr.bf16.mxu0 %v1031
    %1095 = vmatpush1.bf16.msra.mxu0 %v1030
    %1096 = vmatprep.subr.bf16.mxu0 %v1033
    %1097 = vmatpush1.bf16.msra.mxu0 %v1032
    %1098 = vmatprep.subr.bf16.mxu0 %v1035
    %1099 = vmatpush1.bf16.msra.mxu0 %v1034
    %1100 = vmatprep.subr.bf16.mxu0 %v1037
    %1101 = vmatpush1.bf16.msra.mxu0 %v1036
    %1102 = vmatprep.subr.bf16.mxu0 %v1039
    %1103 = vmatpush1.bf16.msra.mxu0 %v1038
    %1104 = vmatprep.mubr.bf16.mxu0 %v867
    %1105 = vmatmul.mubr.bf16.gmra.mrb[0].mxu0 %v866
    %v1106 = vpop.f32.mrb[0].mxu0
    %v1107 = vadd.f32 %v905, %v1106
    %v1108 = vpop.f32.mrb[0].mxu0
    %v1109 = vadd.f32 %v909, %v1108
    %v1110 = vpop.f32.mrb[0].mxu0
    %v1111 = vadd.f32 %v905, %v1110
    %v1112 = vpop.f32.mrb[0].mxu0
    %v1113 = vadd.f32 %v909, %v1112
    %1114 = vdwg.mxu0
    %vm1115 = vcmp.gt.f32.partialorder %v1107, 0.0
    %vm1116 = vcmp.gt.f32.partialorder %v1109, 0.0
    %vm1117 = vcmp.gt.f32.partialorder %v1111, 0.0
    %vm1118 = vcmp.gt.f32.partialorder %v1113, 0.0
    %v1119 = vmul.f32 %v1107, 0.01
    %v1120 = vmul.f32 %v1109, 0.01
    %v1121 = vmul.f32 %v1111, 0.01
    %v1122 = vmul.f32 %v1113, 0.01
    %v1123 = vsel %vm1115, %v1107, %v1119
    %v1124 = vsel %vm1116, %v1109, %v1120
    %v1125 = vsel %vm1117, %v1111, %v1121
    %v1126 = vsel %vm1118, %v1113, %v1122
    %v1127 = vld [vmem:[%s5] sm:$0x3]
    %v1129 = vlaneseq
    %v1130 = vshrl.u32 %v1129, 7
    %v1131 = vsub.s32 0, %v1130
    %v1132 = vrot.slane %v1127, %v1131
    %v1133 = vlaneseq
    %v1134 = vshrl.u32 %v1133, 7
    %v1135 = vsub.s32 1, %v1134
    %v1136 = vrot.slane %v1127, %v1135
    %v1139 = vmul.f32 %v1123, %v1132
    %v1140 = vmul.f32 %v1124, %v1136
    %v1141 = vmul.f32 %v1125, %v1132
    %v1142 = vmul.f32 %v1126, %v1136
    %v1143 = vadd.f32 %v1139, %v1140
    %1144 = vadd.xlane.f32.xlu0 %v1143
    %v1145 = vpop.xlane.xlu0 %1144
    %v1146 = vadd.f32 %v1141, %v1142
    %1147 = vadd.xlane.f32.xlu0 %v1146
    %v1148 = vpop.xlane.xlu0 %1147
    %v1149 = vld [vmem:[#allocation2] sm:$0x1]
    %v1151 = vlaneseq
    %v1152 = vshrl.u32 %v1151, 7
    %v1153 = vsub.s32 0, %v1152
    %v1154 = vrot.slane %v1149, %v1153
    %v1156 = vadd.f32 %v1145, %v1154
    %v1157 = vadd.f32 %v1148, %v1154
    %v1158 = vsub.f32 0.0, %v1156
    %v1159 = vsub.f32 0.0, %v1157
    %v1160 = vmul.f32 %v1158, 1.442695
    %v1161 = vpow.pop %v1160
    %v1162 = vmul.f32 %v1159, 1.442695
    %v1163 = vpow.pop %v1162
    %v1164 = vadd.f32 %v1161, 1.0
    %v1165 = vadd.f32 %v1163, 1.0
    %v1166 = vrcp.pop %v1164
    %v1167 = vrcp.pop %v1165
    %vm1168 = vcmask 7168
    %1169 = vst.msk [vmem:[%s7] sm:$0xff] %vm1168, %v1166
    %1170 = vst.msk [vmem:[%s7 + $0x8] sm:$0xff] %vm1168, %v1167
    // Predicated region
    $region38: #{d_forward.1} parent=1 // pred_check
      _
    $region39: #{d_forward.1} parent=1 // pred_check_branch
      %1172 = sbr.rel (0) target = $region41
    $region40: #{d_forward.1} parent=1 // pred_region
      _
    $region41: #{d_forward.1} parent=1 // pred_fallthru
      _
    // Predicated region
    $region42: #{d_forward.1} parent=1 // pred_check
      _
    $region43: #{d_forward.1} parent=1 // pred_check_branch
      %1174 = sbr.rel (0) target = $region45
    $region44: #{d_forward.1} parent=1 // pred_region
      _
    $region45: #{d_forward.1} parent=1 // pred_fallthru
      _
    %1175 = vsyncpa [#allocation4], 1
    %1176 = vsyncpa [#allocation6], 1

</llo_original>
